<compile_context>
chip_gen: v7x
topology: tpu7x:2x2x1
jax: 0.10.0
libtpu: 0.0.40
codegen_flags: <defaults>
</compile_context>

<pallas_src>
import functools

import jax
import jax.numpy as jnp
from jax.experimental import pallas as pl
from jax.experimental.pallas import tpu as pltpu


def _round_up(x, m):
    return ((x + m - 1) // m) * m


def _apply_act(y, alpha, act):
    # act is a static (compile-time) string; alpha is the PReLU scalar (or None).
    if act == "relu":
        return jnp.maximum(y, 0.0)
    if act == "prelu":
        return jnp.where(y >= 0.0, y, alpha * y)
    raise ValueError(f"unknown activation {act!r}")


# ---------------------------------------------------------------------------
# Conv2d(C, O, 3, stride=1, VALID) + activation  (im2col fused in-kernel)
# ---------------------------------------------------------------------------
def _conv_body(x_ref, w_ref, b_ref, o_ref, alpha, *, width, act):
    hw = o_ref.shape[-1]                    # lane-dense output width (padded H*W)
    xall = x_ref[...]                       # (Cp, Lp) bf16, one image
    acc = jnp.zeros(o_ref.shape, jnp.float32)
    for kh in range(3):
        for kw in range(3):
            off = kh * width + kw           # static lane shift for this tap
            acc = acc + jnp.dot(
                w_ref[kh * 3 + kw],         # (Op, Cp) bf16
                xall[:, off:off + hw],      # (Cp, hw) bf16
                preferred_element_type=jnp.float32,
            )
    y = acc + b_ref[...]                    # (Op, 1) bias broadcast over lanes
    o_ref[...] = _apply_act(y, alpha, act)


def _conv_relu_kernel(x_ref, w_ref, b_ref, o_ref, *, width):
    _conv_body(x_ref, w_ref, b_ref, o_ref, None, width=width, act="relu")


def _conv_prelu_kernel(x_ref, w_ref, b_ref, alpha_ref, o_ref, *, width):
    _conv_body(x_ref, w_ref, b_ref, o_ref, alpha_ref[0], width=width, act="prelu")


def conv2d3x3_act(x, w, b, alpha, act):
    """x: NCHW f32 -> NCHW f32 (valid 3x3 conv + activation)."""
    N, C, H, W = x.shape
    O = w.shape[0]
    Ho, Wo = H - 2, W - 2
    HW = H * W
    Cp = _round_up(C, 16)                    # bf16 sublane packing
    Op = _round_up(O, 8)
    HWp = _round_up(HW, 128)                 # lane-dense output width
    Lp = _round_up(HWp + 2 * W + 2, 128)     # room for the 9 tap shifts

    xf = jnp.pad(x.reshape(N, C, HW).astype(jnp.bfloat16),
                 ((0, 0), (0, Cp - C), (0, Lp - HW)))
    w_taps = jnp.pad(
        w.transpose(2, 3, 0, 1).reshape(9, O, C).astype(jnp.bfloat16),
        ((0, 0), (0, Op - O), (0, Cp - C)))
    b2 = jnp.pad(b.astype(jnp.float32), (0, Op - O)).reshape(Op, 1)

    in_specs = [
        pl.BlockSpec((None, Cp, Lp), lambda n: (n, 0, 0)),   # per-image slab
        pl.BlockSpec((9, Op, Cp), lambda n: (0, 0, 0)),      # 9 tap weight mats
        pl.BlockSpec((Op, 1), lambda n: (0, 0)),             # bias column
    ]
    operands = [xf, w_taps, b2]
    if act == "prelu":
        kernel = functools.partial(_conv_prelu_kernel, width=W)
        in_specs.append(pl.BlockSpec(memory_space=pltpu.MemorySpace.SMEM))
        operands.append(jnp.asarray(alpha, jnp.float32).reshape(1))
    else:
        kernel = functools.partial(_conv_relu_kernel, width=W)

    out = pl.pallas_call(
        kernel,
        out_shape=jax.ShapeDtypeStruct((N, Op, HWp), jnp.float32),
        grid=(N,),
        in_specs=in_specs,
        out_specs=pl.BlockSpec((None, Op, HWp), lambda n: (n, 0, 0)),
        compiler_params=pltpu.CompilerParams(dimension_semantics=("parallel",)),
    )(*operands)

    # Valid-conv result is the top-left (Ho, Wo) of each full (H, W) plane; this
    # single slice lands directly in NCHW (no transpose needed).
    return out[:, :, :HW].reshape(N, Op, H, W)[:, :O, :Ho, :Wo]


# ---------------------------------------------------------------------------
# MaxPool2d(kernel=3, stride=3, VALID) + activation
# ---------------------------------------------------------------------------
def _pool_body(x_ref, o_ref, alpha, *, width, act):
    hw = o_ref.shape[-1]
    xall = x_ref[...]                                   # (TR, Lp) f32
    m = xall[:, 0:hw]
    for kh in range(3):
        for kw in range(3):
            if kh == 0 and kw == 0:
                continue
            off = kh * width + kw
            m = jnp.maximum(m, xall[:, off:off + hw])   # pure-VPU maximum tree
    o_ref[...] = _apply_act(m, alpha, act)


def _pool_relu_kernel(x_ref, o_ref, *, width):
    _pool_body(x_ref, o_ref, None, width=width, act="relu")


def _pool_prelu_kernel(x_ref, alpha_ref, o_ref, *, width):
    _pool_body(x_ref, o_ref, alpha_ref[0], width=width, act="prelu")


def maxpool3_act(x, alpha, act):
    """x: NCHW f32 -> NCHW f32 (3x3 stride-3 max pool + activation)."""
    N, C, H, W = x.shape
    Ho, Wo = (H - 3) // 3 + 1, (W - 3) // 3 + 1
    HW = H * W
    R = N * C
    TR = 8                                   # rows per grid step (sublane tile)
    Rp = _round_up(R, TR)
    HWp = _round_up(HW, 128)
    Lp = _round_up(HWp + 2 * W + 2, 128)

    xf = jnp.pad(x.astype(jnp.float32).reshape(R, HW),
                 ((0, Rp - R), (0, Lp - HW)))

    in_specs = [pl.BlockSpec((TR, Lp), lambda i: (i, 0))]
    operands = [xf]
    if act == "prelu":
        kernel = functools.partial(_pool_prelu_kernel, width=W)
        in_specs.append(pl.BlockSpec(memory_space=pltpu.MemorySpace.SMEM))
        operands.append(jnp.asarray(alpha, jnp.float32).reshape(1))
    else:
        kernel = functools.partial(_pool_relu_kernel, width=W)

    out = pl.pallas_call(
        kernel,
        out_shape=jax.ShapeDtypeStruct((Rp, HWp), jnp.float32),
        grid=(Rp // TR,),
        in_specs=in_specs,
        out_specs=pl.BlockSpec((TR, HWp), lambda i: (i, 0)),
        compiler_params=pltpu.CompilerParams(dimension_semantics=("parallel",)),
    )(*operands)

    # Stride-3 downsample of the dense sliding-max picks out the pooled values.
    m_full = out[:R, :HW].reshape(N, C, H, W)
    return m_full[:, :, :3 * Ho:3, :3 * Wo:3]


# ---------------------------------------------------------------------------
# ModuleDict.forward equivalent (choice/act are static Python strings)
# ---------------------------------------------------------------------------
def module_dict_forward(x, params, choice, act):
    if act not in ("relu", "prelu"):
        raise KeyError(act)
    if choice == "conv":
        return conv2d3x3_act(x, params["conv_w"], params["conv_b"],
                             params["prelu_a"], act)
    if choice == "pool":
        return maxpool3_act(x, params["prelu_a"], act)
    raise KeyError(choice)


# ---------------------------------------------------------------------------
# Demo / self-check
# ---------------------------------------------------------------------------
if __name__ == "__main__":
    key = jax.random.PRNGKey(0)
    kx, kw, kb = jax.random.split(key, 3)

    N, C, H, W = 2, 10, 16, 16              # Conv2d(10, 10, 3) requires C_in = 10
    x = jax.random.normal(kx, (N, C, H, W), jnp.float32)

    fan_in = C * 3 * 3
    bound = 1.0 / (fan_in ** 0.5)
    conv_w = jax.random.uniform(kw, (10, C, 3, 3), jnp.float32, -bound, bound)
    conv_b = jax.random.uniform(kb, (10,), jnp.float32, -bound, bound)
    prelu_a = jnp.array([0.25], jnp.float32)  # nn.PReLU() default init

    params = dict(conv_w=conv_w, conv_b=conv_b, prelu_a=prelu_a)

    results = {}
    for choice in ("conv", "pool"):
        for act in ("relu", "prelu"):
            y = module_dict_forward(x, params, choice, act)
            jax.block_until_ready(y)
            results[(choice, act)] = y

    # Plain-JAX reference for sanity checking.
    conv_lin = jax.lax.conv_general_dilated(
        x, conv_w, (1, 1), "VALID",
        dimension_numbers=("NCHW", "OIHW", "NCHW"),
    ) + conv_b[None, :, None, None]
    pool_lin = jax.lax.reduce_window(
        x, -jnp.inf, jax.lax.max, (1, 1, 3, 3), (1, 1, 3, 3), "VALID")
    refs = {
        ("conv", "relu"): jnp.maximum(conv_lin, 0.0),
        ("conv", "prelu"): jnp.where(conv_lin >= 0, conv_lin, 0.25 * conv_lin),
        ("pool", "relu"): jnp.maximum(pool_lin, 0.0),
        ("pool", "prelu"): jnp.where(pool_lin >= 0, pool_lin, 0.25 * pool_lin),
    }

    for k, v in results.items():
        assert v.shape == refs[k].shape, (k, v.shape, refs[k].shape)
        assert jnp.allclose(v, refs[k], rtol=5e-2, atol=5e-2), f"mismatch for {k}"

    print("KERNEL_OK")
</pallas_src>

<mosaic_0001>
module attributes {stable_mosaic.version = 11 : i64} {
  func.func @_conv_relu_kernel(%arg0: i32, %arg1: memref<1x16x384xbf16, #tpu.memory_space<vmem>>, %arg2: memref<9x16x16xbf16, #tpu.memory_space<vmem>>, %arg3: memref<16x1xf32, #tpu.memory_space<vmem>>, %arg4: memref<1x16x256xf32, #tpu.memory_space<vmem>>) attributes {dimension_semantics = [#tpu.dimension_semantics<parallel>], iteration_bounds = array<i64: 2>, scalar_prefetch = 0 : i64, scratch_operands = 0 : i64, tpu.core_type = #tpu.core_type<tc>, window_params = [{transform_indices = @transform_0, window_bounds = array<i64: 1, 16, 384>}, {pipeline_mode = #tpu.pipeline_mode<synchronous>, transform_indices = @transform_1, window_bounds = array<i64: 9, 16, 16>}, {pipeline_mode = #tpu.pipeline_mode<synchronous>, transform_indices = @transform_2, window_bounds = array<i64: 16, 1>}, {transform_indices = @transform_3, window_bounds = array<i64: 1, 16, 256>}]} {
    %c0 = arith.constant 0 : index
    %c0_0 = arith.constant 0 : index
    %c0_1 = arith.constant 0 : index
    %0 = vector.load %arg1[%c0, %c0_0, %c0_1] : memref<1x16x384xbf16, #tpu.memory_space<vmem>>, vector<1x16x384xbf16>
    %1 = vector.shape_cast %0 : vector<1x16x384xbf16> to vector<16x384xbf16>
    %cst = arith.constant 0.000000e+00 : f32
    %2 = vector.broadcast %cst : f32 to vector<16x256xf32>
    %c0_2 = arith.constant 0 : index
    %c0_3 = arith.constant 0 : index
    %c0_4 = arith.constant 0 : index
    %3 = vector.load %arg2[%c0_2, %c0_3, %c0_4] : memref<9x16x16xbf16, #tpu.memory_space<vmem>>, vector<1x16x16xbf16>
    %4 = vector.shape_cast %3 : vector<1x16x16xbf16> to vector<16x16xbf16>
    %5 = vector.extract_strided_slice %1 {offsets = [0, 0], sizes = [16, 256], strides = [1, 1]} : vector<16x384xbf16> to vector<16x256xbf16>
    %cst_5 = arith.constant dense<0.000000e+00> : vector<16x256xf32>
    %6 = tpu.matmul %4, %5, %cst_5 {dimension_numbers = #tpu.dot_dimension_numbers<[1], [0], [0], [1], [0, 0, 1, 1], [], []>} : vector<16x16xbf16>, vector<16x256xbf16>, vector<16x256xf32> -> vector<16x256xf32>
    %7 = arith.addf %2, %6 : vector<16x256xf32>
    %c1 = arith.constant 1 : index
    %c0_6 = arith.constant 0 : index
    %c0_7 = arith.constant 0 : index
    %8 = vector.load %arg2[%c1, %c0_6, %c0_7] : memref<9x16x16xbf16, #tpu.memory_space<vmem>>, vector<1x16x16xbf16>
    %9 = vector.shape_cast %8 : vector<1x16x16xbf16> to vector<16x16xbf16>
    %10 = vector.extract_strided_slice %1 {offsets = [0, 1], sizes = [16, 256], strides = [1, 1]} : vector<16x384xbf16> to vector<16x256xbf16>
    %cst_8 = arith.constant dense<0.000000e+00> : vector<16x256xf32>
    %11 = tpu.matmul %9, %10, %cst_8 {dimension_numbers = #tpu.dot_dimension_numbers<[1], [0], [0], [1], [0, 0, 1, 1], [], []>} : vector<16x16xbf16>, vector<16x256xbf16>, vector<16x256xf32> -> vector<16x256xf32>
    %12 = arith.addf %7, %11 : vector<16x256xf32>
    %c2 = arith.constant 2 : index
    %c0_9 = arith.constant 0 : index
    %c0_10 = arith.constant 0 : index
    %13 = vector.load %arg2[%c2, %c0_9, %c0_10] : memref<9x16x16xbf16, #tpu.memory_space<vmem>>, vector<1x16x16xbf16>
    %14 = vector.shape_cast %13 : vector<1x16x16xbf16> to vector<16x16xbf16>
    %15 = vector.extract_strided_slice %1 {offsets = [0, 2], sizes = [16, 256], strides = [1, 1]} : vector<16x384xbf16> to vector<16x256xbf16>
    %cst_11 = arith.constant dense<0.000000e+00> : vector<16x256xf32>
    %16 = tpu.matmul %14, %15, %cst_11 {dimension_numbers = #tpu.dot_dimension_numbers<[1], [0], [0], [1], [0, 0, 1, 1], [], []>} : vector<16x16xbf16>, vector<16x256xbf16>, vector<16x256xf32> -> vector<16x256xf32>
    %17 = arith.addf %12, %16 : vector<16x256xf32>
    %c3 = arith.constant 3 : index
    %c0_12 = arith.constant 0 : index
    %c0_13 = arith.constant 0 : index
    %18 = vector.load %arg2[%c3, %c0_12, %c0_13] : memref<9x16x16xbf16, #tpu.memory_space<vmem>>, vector<1x16x16xbf16>
    %19 = vector.shape_cast %18 : vector<1x16x16xbf16> to vector<16x16xbf16>
    %20 = vector.extract_strided_slice %1 {offsets = [0, 16], sizes = [16, 256], strides = [1, 1]} : vector<16x384xbf16> to vector<16x256xbf16>
    %cst_14 = arith.constant dense<0.000000e+00> : vector<16x256xf32>
    %21 = tpu.matmul %19, %20, %cst_14 {dimension_numbers = #tpu.dot_dimension_numbers<[1], [0], [0], [1], [0, 0, 1, 1], [], []>} : vector<16x16xbf16>, vector<16x256xbf16>, vector<16x256xf32> -> vector<16x256xf32>
    %22 = arith.addf %17, %21 : vector<16x256xf32>
    %c4 = arith.constant 4 : index
    %c0_15 = arith.constant 0 : index
    %c0_16 = arith.constant 0 : index
    %23 = vector.load %arg2[%c4, %c0_15, %c0_16] : memref<9x16x16xbf16, #tpu.memory_space<vmem>>, vector<1x16x16xbf16>
    %24 = vector.shape_cast %23 : vector<1x16x16xbf16> to vector<16x16xbf16>
    %25 = vector.extract_strided_slice %1 {offsets = [0, 17], sizes = [16, 256], strides = [1, 1]} : vector<16x384xbf16> to vector<16x256xbf16>
    %cst_17 = arith.constant dense<0.000000e+00> : vector<16x256xf32>
    %26 = tpu.matmul %24, %25, %cst_17 {dimension_numbers = #tpu.dot_dimension_numbers<[1], [0], [0], [1], [0, 0, 1, 1], [], []>} : vector<16x16xbf16>, vector<16x256xbf16>, vector<16x256xf32> -> vector<16x256xf32>
    %27 = arith.addf %22, %26 : vector<16x256xf32>
    %c5 = arith.constant 5 : index
    %c0_18 = arith.constant 0 : index
    %c0_19 = arith.constant 0 : index
    %28 = vector.load %arg2[%c5, %c0_18, %c0_19] : memref<9x16x16xbf16, #tpu.memory_space<vmem>>, vector<1x16x16xbf16>
    %29 = vector.shape_cast %28 : vector<1x16x16xbf16> to vector<16x16xbf16>
    %30 = vector.extract_strided_slice %1 {offsets = [0, 18], sizes = [16, 256], strides = [1, 1]} : vector<16x384xbf16> to vector<16x256xbf16>
    %cst_20 = arith.constant dense<0.000000e+00> : vector<16x256xf32>
    %31 = tpu.matmul %29, %30, %cst_20 {dimension_numbers = #tpu.dot_dimension_numbers<[1], [0], [0], [1], [0, 0, 1, 1], [], []>} : vector<16x16xbf16>, vector<16x256xbf16>, vector<16x256xf32> -> vector<16x256xf32>
    %32 = arith.addf %27, %31 : vector<16x256xf32>
    %c6 = arith.constant 6 : index
    %c0_21 = arith.constant 0 : index
    %c0_22 = arith.constant 0 : index
    %33 = vector.load %arg2[%c6, %c0_21, %c0_22] : memref<9x16x16xbf16, #tpu.memory_space<vmem>>, vector<1x16x16xbf16>
    %34 = vector.shape_cast %33 : vector<1x16x16xbf16> to vector<16x16xbf16>
    %35 = vector.extract_strided_slice %1 {offsets = [0, 32], sizes = [16, 256], strides = [1, 1]} : vector<16x384xbf16> to vector<16x256xbf16>
    %cst_23 = arith.constant dense<0.000000e+00> : vector<16x256xf32>
    %36 = tpu.matmul %34, %35, %cst_23 {dimension_numbers = #tpu.dot_dimension_numbers<[1], [0], [0], [1], [0, 0, 1, 1], [], []>} : vector<16x16xbf16>, vector<16x256xbf16>, vector<16x256xf32> -> vector<16x256xf32>
    %37 = arith.addf %32, %36 : vector<16x256xf32>
    %c7 = arith.constant 7 : index
    %c0_24 = arith.constant 0 : index
    %c0_25 = arith.constant 0 : index
    %38 = vector.load %arg2[%c7, %c0_24, %c0_25] : memref<9x16x16xbf16, #tpu.memory_space<vmem>>, vector<1x16x16xbf16>
    %39 = vector.shape_cast %38 : vector<1x16x16xbf16> to vector<16x16xbf16>
    %40 = vector.extract_strided_slice %1 {offsets = [0, 33], sizes = [16, 256], strides = [1, 1]} : vector<16x384xbf16> to vector<16x256xbf16>
    %cst_26 = arith.constant dense<0.000000e+00> : vector<16x256xf32>
    %41 = tpu.matmul %39, %40, %cst_26 {dimension_numbers = #tpu.dot_dimension_numbers<[1], [0], [0], [1], [0, 0, 1, 1], [], []>} : vector<16x16xbf16>, vector<16x256xbf16>, vector<16x256xf32> -> vector<16x256xf32>
    %42 = arith.addf %37, %41 : vector<16x256xf32>
    %c8 = arith.constant 8 : index
    %c0_27 = arith.constant 0 : index
    %c0_28 = arith.constant 0 : index
    %43 = vector.load %arg2[%c8, %c0_27, %c0_28] : memref<9x16x16xbf16, #tpu.memory_space<vmem>>, vector<1x16x16xbf16>
    %44 = vector.shape_cast %43 : vector<1x16x16xbf16> to vector<16x16xbf16>
    %45 = vector.extract_strided_slice %1 {offsets = [0, 34], sizes = [16, 256], strides = [1, 1]} : vector<16x384xbf16> to vector<16x256xbf16>
    %cst_29 = arith.constant dense<0.000000e+00> : vector<16x256xf32>
    %46 = tpu.matmul %44, %45, %cst_29 {dimension_numbers = #tpu.dot_dimension_numbers<[1], [0], [0], [1], [0, 0, 1, 1], [], []>} : vector<16x16xbf16>, vector<16x256xbf16>, vector<16x256xf32> -> vector<16x256xf32>
    %47 = arith.addf %42, %46 : vector<16x256xf32>
    %c0_30 = arith.constant 0 : index
    %c0_31 = arith.constant 0 : index
    %48 = vector.load %arg3[%c0_30, %c0_31] : memref<16x1xf32, #tpu.memory_space<vmem>>, vector<16x1xf32>
    %49 = vector.broadcast %48 : vector<16x1xf32> to vector<16x256xf32>
    %50 = arith.addf %47, %49 : vector<16x256xf32>
    %cst_32 = arith.constant 0.000000e+00 : f32
    %51 = vector.broadcast %cst_32 : f32 to vector<16x256xf32>
    %52 = arith.maximumf %50, %51 : vector<16x256xf32>
    %c0_33 = arith.constant 0 : index
    %c0_34 = arith.constant 0 : index
    %c0_35 = arith.constant 0 : index
    %53 = vector.load %arg4[%c0_33, %c0_34, %c0_35] : memref<1x16x256xf32, #tpu.memory_space<vmem>>, vector<1x16x256xf32>
    %54 = vector.shape_cast %53 : vector<1x16x256xf32> to vector<16x256xf32>
    %55 = vector.shape_cast %52 : vector<16x256xf32> to vector<1x16x256xf32>
    tpu.vector_store %arg4[%c0_33, %c0_34, %c0_35], %55 {strides = array<i32>} : memref<1x16x256xf32, #tpu.memory_space<vmem>>, vector<1x16x256xf32>,
    return
  }
  func.func @transform_0(%arg0: i32) -> (i32, i32, i32) {
    %c0_i32 = arith.constant 0 : i32
    %c0_i32_0 = arith.constant 0 : i32
    %c0_i32_1 = arith.constant 0 : i32
    return %arg0, %c0_i32, %c0_i32_0 : i32, i32, i32
  }
  func.func @transform_1(%arg0: i32) -> (i32, i32, i32) {
    %c0_i32 = arith.constant 0 : i32
    %c0_i32_0 = arith.constant 0 : i32
    %c0_i32_1 = arith.constant 0 : i32
    %c0_i32_2 = arith.constant 0 : i32
    return %c0_i32, %c0_i32_0, %c0_i32_1 : i32, i32, i32
  }
  func.func @transform_2(%arg0: i32) -> (i32, i32) {
    %c0_i32 = arith.constant 0 : i32
    %c0_i32_0 = arith.constant 0 : i32
    %c0_i32_1 = arith.constant 0 : i32
    return %c0_i32, %c0_i32_0 : i32, i32
  }
  func.func @transform_3(%arg0: i32) -> (i32, i32, i32) {
    %c0_i32 = arith.constant 0 : i32
    %c0_i32_0 = arith.constant 0 : i32
    %c0_i32_1 = arith.constant 0 : i32
    return %arg0, %c0_i32, %c0_i32_0 : i32, i32, i32
  }
}

</mosaic_0001>

<llo_original>
// kernel: tpu_custom_call.1
$region0: #{tpu_custom_call.1}
  #allocation0 [shape = 'u32[]', space=smem, size = 0x4, offset = 0x4, fixed_abs, tag = 'smem constant byte address 0x4 - core index']
  #allocation1 [shape = 'u32[144,128]{1,0:T(1,128)}', space=vmem, size = 0x12000, scoped, tag = 'internal scratch']
  %s0 = inlined_call_operand.hbm [shape: bf16[2,16,384], index: 0, kind: input, shape index: {}]
  %s1 = inlined_call_operand.hbm [shape: bf16[9,16,16], index: 1, kind: input, shape index: {}]
  %s2 = inlined_call_operand.vmem [shape: f32[16,1], index: 2, kind: input, shape index: {}]
  %s3 = inlined_call_operand.hbm [shape: f32[2,16,256], index: 3, kind: output, shape index: {}]
  %s4 = sld [smem:[#allocation0]]
  $region53: #{tpu_custom_call.1} parent=0
    _
  %s6 = ssub.s32 1, %s4
  %s7 = scalar_select 0, %s6, %s4
  $region1: #{tpu_custom_call.1} parent=0
    #allocation2 [shape = 'u8[24576]{0}', space=vmem, size = 0x6000, scoped, tag = 'input window, operand 0']
    #allocation3 [shape = 's32[2]{0}', space=sflag, size = 0x8, scoped, tag = 'scoped memory for tpu_custom_call.1']
    #allocation4 [shape = 's32[2]{0}', space=sflag, size = 0x8, scoped, tag = 'scoped memory for tpu_custom_call.1']
    #allocation5 [shape = 'u8[36864]{0}', space=vmem, size = 0x9000, scoped, tag = 'input window, operand 1, single buffered']
    #allocation6 [shape = 's32[1]{0}', space=sflag, size = 0x4, scoped, tag = 'scoped memory for tpu_custom_call.1']
    #allocation7 [shape = 'u8[32768]{0}', space=vmem, size = 0x8000, scoped, tag = 'output window, operand 0']
    %8 = vsyncpa [#allocation3], 0
    %s9 = scalar_lea.sflag [#allocation3], 1
    %10 = vsyncpa %s9, 0
    %11 = vsyncpa [#allocation6], 0
    %12 = vsyncpa [#allocation4], 0
    %s13 = scalar_lea.sflag [#allocation4], 1
    %14 = vsyncpa %s13, 0
    loop: start=0, step=1, limit=4
    $region2: #{tpu_custom_call.1} parent=1 // loop_pre_header
      _
    $region3: #{tpu_custom_call.1} parent=1 // loop_header
      %s16 = sphi 0, %s20
      %p17 = scmp.ge.s32.totalorder %s16, 4
      %s26 = sphi 0, %s28
      %s29 = sphi 0, %s26
      %s30 = sphi 0, %s29
      %s46 = sphi 0, %s30
      %s50 = sphi 0, %s50
      %s52 = sphi 0, %s50
      %s53 = sphi 0, %s52
      %s67 = sphi 0, %s53
      %s71 = sphi 0, %s71
      %s73 = sphi 0, %s71
      %s74 = sphi 0, %s73
      %s88 = sphi 0, %s74
      %s94 = sphi 0, %s96
      %s97 = sphi 0, %s94
      %s98 = sphi 0, %s97
      %s114 = sphi 0, %s98
    $region4: #{tpu_custom_call.1} parent=1 // loop_header_branch
      %19 = sbr.rel (%p17) target = $region8
    $region5: #{tpu_custom_call.1} parent=1 // loop_body
      %s21 = ssub.s32 %s16, 1
      %s22 = ssub.s32 %s16, 2
      %s23 = sadd.s32 %s16, 1
      %s24 = ssub.s32 %s16, %s23
      %p25 = scmp.eq.s32.totalorder %s24, 0
      %s27 = sadd.s32 %s26, 1
      %s28 = scalar_select %p25, %s26, %s27
      %p31 = pneg %p25
      %p32 = scmp.eq.s32.totalorder %s16, 1
      %p33 = por %p31, %p32
      %p34 = scmp.ne.s32.totalorder %s26, %s29
      %p35 = scmp.eq.s32.totalorder %s16, 0
      %p36 = por %p34, %p35
      %p37 = scmp.ne.s32.totalorder %s26, %s29
      %p38 = scmp.eq.s32.totalorder %s21, 1
      %p39 = por %p37, %p38
      %p40 = scmp.ne.s32.totalorder %s29, %s30
      %p41 = scmp.eq.s32.totalorder %s21, 0
      %p42 = por %p40, %p41
      %p43 = scmp.ne.s32.totalorder %s29, %s30
      %p44 = scmp.eq.s32.totalorder %s22, 1
      %p45 = por %p43, %p44
      %p47 = scmp.ne.s32.totalorder %s30, %s46
      %p48 = scmp.eq.s32.totalorder %s22, 0
      %p49 = por %p47, %p48
      %s51 = sadd.s32 %s50, 1
      %p54 = scmp.eq.s32.totalorder %s16, 1
      %p55 = scmp.ne.s32.totalorder %s50, %s52
      %p56 = scmp.eq.s32.totalorder %s16, 0
      %p57 = por %p55, %p56
      %p58 = scmp.ne.s32.totalorder %s50, %s52
      %p59 = scmp.eq.s32.totalorder %s21, 1
      %p60 = por %p58, %p59
      %p61 = scmp.ne.s32.totalorder %s52, %s53
      %p62 = scmp.eq.s32.totalorder %s21, 0
      %p63 = por %p61, %p62
      %p64 = scmp.ne.s32.totalorder %s52, %s53
      %p65 = scmp.eq.s32.totalorder %s22, 1
      %p66 = por %p64, %p65
      %p68 = scmp.ne.s32.totalorder %s53, %s67
      %p69 = scmp.eq.s32.totalorder %s22, 0
      %p70 = por %p68, %p69
      %s72 = sadd.s32 %s71, 1
      %p75 = scmp.eq.s32.totalorder %s16, 1
      %p76 = scmp.ne.s32.totalorder %s71, %s73
      %p77 = scmp.eq.s32.totalorder %s16, 0
      %p78 = por %p76, %p77
      %p79 = scmp.ne.s32.totalorder %s71, %s73
      %p80 = scmp.eq.s32.totalorder %s21, 1
      %p81 = por %p79, %p80
      %p82 = scmp.ne.s32.totalorder %s73, %s74
      %p83 = scmp.eq.s32.totalorder %s21, 0
      %p84 = por %p82, %p83
      %p85 = scmp.ne.s32.totalorder %s73, %s74
      %p86 = scmp.eq.s32.totalorder %s22, 1
      %p87 = por %p85, %p86
      %p89 = scmp.ne.s32.totalorder %s74, %s88
      %p90 = scmp.eq.s32.totalorder %s22, 0
      %p91 = por %p89, %p90
      %s92 = ssub.s32 %s16, %s23
      %p93 = scmp.eq.s32.totalorder %s92, 0
      %s95 = sadd.s32 %s94, 1
      %s96 = scalar_select %p93, %s94, %s95
      %p99 = pneg %p93
      %p100 = scmp.eq.s32.totalorder %s16, 1
      %p101 = por %p99, %p100
      %p102 = scmp.ne.s32.totalorder %s94, %s97
      %p103 = scmp.eq.s32.totalorder %s16, 0
      %p104 = por %p102, %p103
      %p105 = scmp.ne.s32.totalorder %s94, %s97
      %p106 = scmp.eq.s32.totalorder %s21, 1
      %p107 = por %p105, %p106
      %p108 = scmp.ne.s32.totalorder %s97, %s98
      %p109 = scmp.eq.s32.totalorder %s21, 0
      %p110 = por %p108, %p109
      %p111 = scmp.ne.s32.totalorder %s97, %s98
      %p112 = scmp.eq.s32.totalorder %s22, 1
      %p113 = por %p111, %p112
      %p115 = scmp.ne.s32.totalorder %s98, %s114
      %p116 = scmp.eq.s32.totalorder %s22, 0
      %p117 = por %p115, %p116
      %p118 = scmp.le.s32.totalorder 1, %s16
      %p119 = scmp.lt.s32.totalorder %s16, 3
      %p120 = pnand %p118, %p119
      %p121 = pneg %p120
      // Predicated region
      $region9: #{tpu_custom_call.1} parent=5 // pred_check
        _
      $region10: #{tpu_custom_call.1} parent=5 // pred_check_branch
        %123 = sbr.rel (%p120) target = $region12
      $region11: #{tpu_custom_call.1} parent=5 // pred_region
        %s124 = ssub.s32 %s16, 1
        // Predicated region
        $region13: #{tpu_custom_call.1} parent=11 // pred_check
          %p125 = pneg %p63
        $region14: #{tpu_custom_call.1} parent=11 // pred_check_branch
          %127 = sbr.rel (%p125) target = $region16
        $region15: #{tpu_custom_call.1} parent=11 // pred_region
          %s129 = ssub.s32 1152, 1152
          %130 = vsyncadd [#allocation6], %s129
          %s131 = sshll.u32 [#allocation5], 4
          %s132 = int_to_ptr.vmem [resolvable:$true] %s131
          %137 = dma.hbm_to_vmem [thread:$0]  %s1, 1152, %s132, [#allocation6], 64, 64, 4
        $region16: #{tpu_custom_call.1} parent=11 // pred_fallthru
          _
        // Predicated region
        $region17: #{tpu_custom_call.1} parent=11 // pred_check
          %p138 = pneg %p84
        $region18: #{tpu_custom_call.1} parent=11 // pred_check_branch
          %140 = sbr.rel (%p138) target = $region20
        $region19: #{tpu_custom_call.1} parent=11 // pred_region
          _
        $region20: #{tpu_custom_call.1} parent=11 // pred_fallthru
          _
      $region12: #{tpu_custom_call.1} parent=5 // pred_fallthru
        _
      %p141 = scmp.lt.s32.totalorder %s16, 2
      // Predicated region
      $region21: #{tpu_custom_call.1} parent=5 // pred_check
        %p142 = pneg %p141
      $region22: #{tpu_custom_call.1} parent=5 // pred_check_branch
        %144 = sbr.rel (%p142) target = $region24
      $region23: #{tpu_custom_call.1} parent=5 // pred_region
        // Predicated region
        $region25: #{tpu_custom_call.1} parent=23 // pred_check
          %p145 = pneg %p36
        $region26: #{tpu_custom_call.1} parent=23 // pred_check_branch
          %147 = sbr.rel (%p145) target = $region28
        $region27: #{tpu_custom_call.1} parent=23 // pred_region
          %s148 = sand.u32 %s26, 1
          %s149 = scalar_lea.sflag [#allocation3], %s148
          %s150 = sand.u32 %s26, 1
          %s151 = smul.addr %s150, 24
          %s152 = scalar_lea.vmem [#allocation2], %s151
          %s154 = ssub.s32 384, 384
          %155 = vsyncadd %s149, %s154
          %s156 = smul.addr %s16, 6
          %s157 = smul.addr %s156, 64
          %s158 = scalar_lea.hbm %s0, %s157
          %s159 = sshll.u32 %s152, 4
          %s160 = int_to_ptr.vmem [resolvable:$true] %s159
          %165 = dma.hbm_to_vmem [thread:$0]  %s158, 384, %s160, %s149, 192, 192, 12
        $region28: #{tpu_custom_call.1} parent=23 // pred_fallthru
          _
      $region24: #{tpu_custom_call.1} parent=5 // pred_fallthru
        _
      %p166 = scmp.le.s32.totalorder 1, %s16
      %p167 = scmp.lt.s32.totalorder %s16, 3
      %p168 = pnand %p166, %p167
      %p169 = pneg %p168
      // Predicated region
      $region29: #{tpu_custom_call.1} parent=5 // pred_check
        _
      $region30: #{tpu_custom_call.1} parent=5 // pred_check_branch
        %171 = sbr.rel (%p168) target = $region32
      $region31: #{tpu_custom_call.1} parent=5 // pred_region
        %s172 = ssub.s32 %s16, 1
        %s173 = sand.u32 %s29, 1
        %s174 = scalar_lea.sflag [#allocation3], %s173
        %s175 = sand.u32 %s29, 1
        %s176 = smul.addr %s175, 24
        %s177 = scalar_lea.vmem [#allocation2], %s176
        // Predicated region
        $region33: #{tpu_custom_call.1} parent=31 // pred_check
          %p178 = pneg %p42
        $region34: #{tpu_custom_call.1} parent=31 // pred_check_branch
          %180 = sbr.rel (%p178) target = $region36
        $region35: #{tpu_custom_call.1} parent=31 // pred_region
          %181 = dma.done %s174, 384
        $region36: #{tpu_custom_call.1} parent=31 // pred_fallthru
          _
        // Predicated region
        $region37: #{tpu_custom_call.1} parent=31 // pred_check
          %p182 = pneg %p63
        $region38: #{tpu_custom_call.1} parent=31 // pred_check_branch
          %184 = sbr.rel (%p182) target = $region40
        $region39: #{tpu_custom_call.1} parent=31 // pred_region
          %185 = dma.done [#allocation6], 1152
        $region40: #{tpu_custom_call.1} parent=31 // pred_fallthru
          _
        %s186 = sand.u32 %s29, 1
        %s187 = scalar_lea.sflag [#allocation3], %s186
        %s188 = sand.u32 %s29, 1
        %s189 = smul.addr %s188, 24
        %s190 = scalar_lea.vmem [#allocation2], %s189
        %p191 = pneg %p42
        %p192 = pneg %p39
        %p193 = pneg %p63
        %p194 = pneg %p60
        %p195 = pneg %p84
        %p196 = pneg %p81
        %p197 = pneg %p110
        %p198 = pneg %p107
        %s199 = sand.u32 %s97, 1
        %s200 = scalar_lea.sflag [#allocation4], %s199
        %s201 = sand.u32 %s97, 1
        %s202 = smul.addr %s201, 32
        %s203 = scalar_lea.vmem [#allocation7], %s202
        %v205 = vld [vmem:[%s177] sm:$0xff]
        %v206 = vld [vmem:[%s177 + $0x8] sm:$0xf]
        %v207 = vld [vmem:[%s177 + $0xc] sm:$0xff]
        %v208 = vld [vmem:[%s177 + $0x14] sm:$0xf]
        %v209 = vld [vmem:[#allocation5] sm:$0xf]
        %v210 = vld [vmem:[#allocation5 + $0x4] sm:$0xf]
        %s211 = scalar_lea.vmem [#allocation5], 8
        %v212 = vld [vmem:[%s211] sm:$0xf]
        %v213 = vld [vmem:[%s211 + $0x4] sm:$0xf]
        %v216 = vunpack.c.l.b16 %v212
        %v217 = vunpack.c.l.b16 %v213
        %v218 = vpack.c.b16 %v217, %v216
        %v223 = vunpack.c.l.b16 %v205
        %v224 = vunpack.c.h.b16 %v205
        %v225 = vunpack.c.l.b16 %v206
        %v226 = vunpack.c.l.b16 %v207
        %v227 = vunpack.c.h.b16 %v207
        %v228 = vunpack.c.l.b16 %v208
        %v229 = vpack.c.b16 %v226, %v223
        %v230 = vpack.c.b16 %v227, %v224
        %v231 = vpack.c.b16 %v228, %v225
        %232 = vrot.lane.b32.xlu0 %v229, 127
        %v233 = vpop.permute.xlu0 %232
        %234 = vrot.lane.b32.xlu0 %v230, 127
        %v235 = vpop.permute.xlu0 %234
        %236 = vrot.lane.b32.xlu0 %v231, 127
        %v237 = vpop.permute.xlu0 %236
        %vm238 = vcmask 1039360
        %v239 = vsel %vm238, %v233, %v235
        %v240 = vsel %vm238, %v235, %v237
        %vm243 = vcmask 130048
        %v245 = vsel %vm243, %v218, 0
        %247 = vmatprep.subr.bf16.mxu0 %v240
        %248 = vmatpush1.bf16.msra.mxu0 %v239
        %249 = vmatprep.subr.bf16.mxu0 0
        %250 = vmatpush1.bf16.msra.mxu0 0
        %251 = vmatprep.subr.bf16.mxu0 0
        %252 = vmatpush1.bf16.msra.mxu0 0
        %253 = vmatprep.subr.bf16.mxu0 0
        %254 = vmatpush1.bf16.msra.mxu0 0
        %255 = vmatprep.subr.bf16.mxu0 0
        %256 = vmatpush1.bf16.msra.mxu0 0
        %257 = vmatprep.subr.bf16.mxu0 0
        %258 = vmatpush1.bf16.msra.mxu0 0
        %259 = vmatprep.subr.bf16.mxu0 0
        %260 = vmatpush1.bf16.msra.mxu0 0
        %261 = vmatprep.subr.bf16.mxu0 0
        %262 = vmatpush1.bf16.msra.mxu0 0
        %263 = vmatprep.subr.bf16.mxu0 0
        %264 = vmatpush1.bf16.msra.mxu0 0
        %265 = vmatprep.subr.bf16.mxu0 0
        %266 = vmatpush1.bf16.msra.mxu0 0
        %267 = vmatprep.subr.bf16.mxu0 0
        %268 = vmatpush1.bf16.msra.mxu0 0
        %269 = vmatprep.subr.bf16.mxu0 0
        %270 = vmatpush1.bf16.msra.mxu0 0
        %271 = vmatprep.subr.bf16.mxu0 0
        %272 = vmatpush1.bf16.msra.mxu0 0
        %273 = vmatprep.subr.bf16.mxu0 0
        %274 = vmatpush1.bf16.msra.mxu0 0
        %275 = vmatprep.subr.bf16.mxu0 0
        %276 = vmatpush1.bf16.msra.mxu0 0
        %277 = vmatprep.subr.bf16.mxu0 0
        %278 = vmatpush1.bf16.msra.mxu0 0
        %279 = vmatprep.mubr.bf16.mxu0 0
        %280 = vmatmul.mubr.bf16.gmra.mrb[0].mxu0 %v245
        %v281 = vpop.f32.mrb[0].mxu0
        %v282 = vadd.f32 0.0, %v281
        %v283 = vpop.f32.mrb[0].mxu0
        %v284 = vadd.f32 0.0, %v283
        %v285 = vpop.f32.mrb[0].mxu0
        %v286 = vadd.f32 0.0, %v285
        %v287 = vpop.f32.mrb[0].mxu0
        %v288 = vadd.f32 0.0, %v287
        %289 = vdwg.mxu0
        %v292 = vunpack.c.l.b16 %v209
        %v293 = vunpack.c.l.b16 %v210
        %v294 = vpack.c.b16 %v293, %v292
        %v298 = vsel %vm243, %v294, 0
        %300 = vmatprep.subr.bf16.mxu0 %v230
        %301 = vmatpush1.bf16.msra.mxu0 %v229
        %302 = vmatprep.subr.bf16.mxu0 0
        %303 = vmatpush1.bf16.msra.mxu0 0
        %304 = vmatprep.subr.bf16.mxu0 0
        %305 = vmatpush1.bf16.msra.mxu0 0
        %306 = vmatprep.subr.bf16.mxu0 0
        %307 = vmatpush1.bf16.msra.mxu0 0
        %308 = vmatprep.subr.bf16.mxu0 0
        %309 = vmatpush1.bf16.msra.mxu0 0
        %310 = vmatprep.subr.bf16.mxu0 0
        %311 = vmatpush1.bf16.msra.mxu0 0
        %312 = vmatprep.subr.bf16.mxu0 0
        %313 = vmatpush1.bf16.msra.mxu0 0
        %314 = vmatprep.subr.bf16.mxu0 0
        %315 = vmatpush1.bf16.msra.mxu0 0
        %316 = vmatprep.subr.bf16.mxu0 0
        %317 = vmatpush1.bf16.msra.mxu0 0
        %318 = vmatprep.subr.bf16.mxu0 0
        %319 = vmatpush1.bf16.msra.mxu0 0
        %320 = vmatprep.subr.bf16.mxu0 0
        %321 = vmatpush1.bf16.msra.mxu0 0
        %322 = vmatprep.subr.bf16.mxu0 0
        %323 = vmatpush1.bf16.msra.mxu0 0
        %324 = vmatprep.subr.bf16.mxu0 0
        %325 = vmatpush1.bf16.msra.mxu0 0
        %326 = vmatprep.subr.bf16.mxu0 0
        %327 = vmatpush1.bf16.msra.mxu0 0
        %328 = vmatprep.subr.bf16.mxu0 0
        %329 = vmatpush1.bf16.msra.mxu0 0
        %330 = vmatprep.subr.bf16.mxu0 0
        %331 = vmatpush1.bf16.msra.mxu0 0
        %332 = vmatprep.mubr.bf16.mxu0 0
        %333 = vmatmul.mubr.bf16.gmra.mrb[0].mxu0 %v298
        %v334 = vpop.f32.mrb[0].mxu0
        %v335 = vadd.f32 %v282, %v334
        %v336 = vpop.f32.mrb[0].mxu0
        %v337 = vadd.f32 %v284, %v336
        %v338 = vpop.f32.mrb[0].mxu0
        %v339 = vadd.f32 %v286, %v338
        %v340 = vpop.f32.mrb[0].mxu0
        %v341 = vadd.f32 %v288, %v340
        %342 = vdwg.mxu0
        %s343 = scalar_lea.vmem [#allocation5], 16
        %v344 = vld [vmem:[%s343] sm:$0xf]
        %v345 = vld [vmem:[%s343 + $0x4] sm:$0xf]
        %v348 = vunpack.c.l.b16 %v344
        %v349 = vunpack.c.l.b16 %v345
        %v350 = vpack.c.b16 %v349, %v348
        %351 = vrot.lane.b32.xlu0 %v229, 126
        %v352 = vpop.permute.xlu0 %351
        %353 = vrot.lane.b32.xlu0 %v230, 126
        %v354 = vpop.permute.xlu0 %353
        %355 = vrot.lane.b32.xlu0 %v231, 126
        %v356 = vpop.permute.xlu0 %355
        %vm357 = vcmask 1031168
        %v358 = vsel %vm357, %v352, %v354
        %v359 = vsel %vm357, %v354, %v356
        %v363 = vsel %vm243, %v350, 0
        %365 = vmatprep.subr.bf16.mxu0 %v359
        %366 = vmatpush1.bf16.msra.mxu0 %v358
        %367 = vmatprep.subr.bf16.mxu0 0
        %368 = vmatpush1.bf16.msra.mxu0 0
        %369 = vmatprep.subr.bf16.mxu0 0
        %370 = vmatpush1.bf16.msra.mxu0 0
        %371 = vmatprep.subr.bf16.mxu0 0
        %372 = vmatpush1.bf16.msra.mxu0 0
        %373 = vmatprep.subr.bf16.mxu0 0
        %374 = vmatpush1.bf16.msra.mxu0 0
        %375 = vmatprep.subr.bf16.mxu0 0
        %376 = vmatpush1.bf16.msra.mxu0 0
        %377 = vmatprep.subr.bf16.mxu0 0
        %378 = vmatpush1.bf16.msra.mxu0 0
        %379 = vmatprep.subr.bf16.mxu0 0
        %380 = vmatpush1.bf16.msra.mxu0 0
        %381 = vmatprep.subr.bf16.mxu0 0
        %382 = vmatpush1.bf16.msra.mxu0 0
        %383 = vmatprep.subr.bf16.mxu0 0
        %384 = vmatpush1.bf16.msra.mxu0 0
        %385 = vmatprep.subr.bf16.mxu0 0
        %386 = vmatpush1.bf16.msra.mxu0 0
        %387 = vmatprep.subr.bf16.mxu0 0
        %388 = vmatpush1.bf16.msra.mxu0 0
        %389 = vmatprep.subr.bf16.mxu0 0
        %390 = vmatpush1.bf16.msra.mxu0 0
        %391 = vmatprep.subr.bf16.mxu0 0
        %392 = vmatpush1.bf16.msra.mxu0 0
        %393 = vmatprep.subr.bf16.mxu0 0
        %394 = vmatpush1.bf16.msra.mxu0 0
        %395 = vmatprep.subr.bf16.mxu0 0
        %396 = vmatpush1.bf16.msra.mxu0 0
        %397 = vmatprep.mubr.bf16.mxu0 0
        %398 = vmatmul.mubr.bf16.gmra.mrb[0].mxu0 %v363
        %v399 = vpop.f32.mrb[0].mxu0
        %v400 = vadd.f32 0.0, %v399
        %v401 = vpop.f32.mrb[0].mxu0
        %v402 = vadd.f32 0.0, %v401
        %v403 = vpop.f32.mrb[0].mxu0
        %v404 = vadd.f32 0.0, %v403
        %v405 = vpop.f32.mrb[0].mxu0
        %v406 = vadd.f32 0.0, %v405
        %407 = vdwg.mxu0
        %v408 = vadd.f32 %v335, %v400
        %v409 = vadd.f32 %v337, %v402
        %v410 = vadd.f32 %v339, %v404
        %v411 = vadd.f32 %v341, %v406
        %s412 = scalar_lea.vmem [#allocation5], 24
        %v413 = vld [vmem:[%s412] sm:$0xf]
        %v414 = vld [vmem:[%s412 + $0x4] sm:$0xf]
        %v417 = vunpack.c.l.b16 %v413
        %v418 = vunpack.c.l.b16 %v414
        %v419 = vpack.c.b16 %v418, %v417
        %420 = vrot.lane.b32.xlu0 %v229, 112
        %v421 = vpop.permute.xlu0 %420
        %422 = vrot.lane.b32.xlu0 %v230, 112
        %v423 = vpop.permute.xlu0 %422
        %424 = vrot.lane.b32.xlu0 %v231, 112
        %v425 = vpop.permute.xlu0 %424
        %vm426 = vcmask 916480
        %v427 = vsel %vm426, %v421, %v423
        %v428 = vsel %vm426, %v423, %v425
        %v432 = vsel %vm243, %v419, 0
        %434 = vmatprep.subr.bf16.mxu0 %v428
        %435 = vmatpush1.bf16.msra.mxu0 %v427
        %436 = vmatprep.subr.bf16.mxu0 0
        %437 = vmatpush1.bf16.msra.mxu0 0
        %438 = vmatprep.subr.bf16.mxu0 0
        %439 = vmatpush1.bf16.msra.mxu0 0
        %440 = vmatprep.subr.bf16.mxu0 0
        %441 = vmatpush1.bf16.msra.mxu0 0
        %442 = vmatprep.subr.bf16.mxu0 0
        %443 = vmatpush1.bf16.msra.mxu0 0
        %444 = vmatprep.subr.bf16.mxu0 0
        %445 = vmatpush1.bf16.msra.mxu0 0
        %446 = vmatprep.subr.bf16.mxu0 0
        %447 = vmatpush1.bf16.msra.mxu0 0
        %448 = vmatprep.subr.bf16.mxu0 0
        %449 = vmatpush1.bf16.msra.mxu0 0
        %450 = vmatprep.subr.bf16.mxu0 0
        %451 = vmatpush1.bf16.msra.mxu0 0
        %452 = vmatprep.subr.bf16.mxu0 0
        %453 = vmatpush1.bf16.msra.mxu0 0
        %454 = vmatprep.subr.bf16.mxu0 0
        %455 = vmatpush1.bf16.msra.mxu0 0
        %456 = vmatprep.subr.bf16.mxu0 0
        %457 = vmatpush1.bf16.msra.mxu0 0
        %458 = vmatprep.subr.bf16.mxu0 0
        %459 = vmatpush1.bf16.msra.mxu0 0
        %460 = vmatprep.subr.bf16.mxu0 0
        %461 = vmatpush1.bf16.msra.mxu0 0
        %462 = vmatprep.subr.bf16.mxu0 0
        %463 = vmatpush1.bf16.msra.mxu0 0
        %464 = vmatprep.subr.bf16.mxu0 0
        %465 = vmatpush1.bf16.msra.mxu0 0
        %466 = vmatprep.mubr.bf16.mxu0 0
        %467 = vmatmul.mubr.bf16.gmra.mrb[0].mxu0 %v432
        %v468 = vpop.f32.mrb[0].mxu0
        %v469 = vadd.f32 0.0, %v468
        %v470 = vpop.f32.mrb[0].mxu0
        %v471 = vadd.f32 0.0, %v470
        %v472 = vpop.f32.mrb[0].mxu0
        %v473 = vadd.f32 0.0, %v472
        %v474 = vpop.f32.mrb[0].mxu0
        %v475 = vadd.f32 0.0, %v474
        %476 = vdwg.mxu0
        %v477 = vadd.f32 %v408, %v469
        %v478 = vadd.f32 %v409, %v471
        %v479 = vadd.f32 %v410, %v473
        %v480 = vadd.f32 %v411, %v475
        %s481 = scalar_lea.vmem [#allocation5], 32
        %v482 = vld [vmem:[%s481] sm:$0xf]
        %v483 = vld [vmem:[%s481 + $0x4] sm:$0xf]
        %v486 = vunpack.c.l.b16 %v482
        %v487 = vunpack.c.l.b16 %v483
        %v488 = vpack.c.b16 %v487, %v486
        %489 = vrot.lane.b32.xlu0 %v229, 111
        %v490 = vpop.permute.xlu0 %489
        %491 = vrot.lane.b32.xlu0 %v230, 111
        %v492 = vpop.permute.xlu0 %491
        %493 = vrot.lane.b32.xlu0 %v231, 111
        %v494 = vpop.permute.xlu0 %493
        %vm495 = vcmask 908288
        %v496 = vsel %vm495, %v490, %v492
        %v497 = vsel %vm495, %v492, %v494
        %v501 = vsel %vm243, %v488, 0
        %503 = vmatprep.subr.bf16.mxu0 %v497
        %504 = vmatpush1.bf16.msra.mxu0 %v496
        %505 = vmatprep.subr.bf16.mxu0 0
        %506 = vmatpush1.bf16.msra.mxu0 0
        %507 = vmatprep.subr.bf16.mxu0 0
        %508 = vmatpush1.bf16.msra.mxu0 0
        %509 = vmatprep.subr.bf16.mxu0 0
        %510 = vmatpush1.bf16.msra.mxu0 0
        %511 = vmatprep.subr.bf16.mxu0 0
        %512 = vmatpush1.bf16.msra.mxu0 0
        %513 = vmatprep.subr.bf16.mxu0 0
        %514 = vmatpush1.bf16.msra.mxu0 0
        %515 = vmatprep.subr.bf16.mxu0 0
        %516 = vmatpush1.bf16.msra.mxu0 0
        %517 = vmatprep.subr.bf16.mxu0 0
        %518 = vmatpush1.bf16.msra.mxu0 0
        %519 = vmatprep.subr.bf16.mxu0 0
        %520 = vmatpush1.bf16.msra.mxu0 0
        %521 = vmatprep.subr.bf16.mxu0 0
        %522 = vmatpush1.bf16.msra.mxu0 0
        %523 = vmatprep.subr.bf16.mxu0 0
        %524 = vmatpush1.bf16.msra.mxu0 0
        %525 = vmatprep.subr.bf16.mxu0 0
        %526 = vmatpush1.bf16.msra.mxu0 0
        %527 = vmatprep.subr.bf16.mxu0 0
        %528 = vmatpush1.bf16.msra.mxu0 0
        %529 = vmatprep.subr.bf16.mxu0 0
        %530 = vmatpush1.bf16.msra.mxu0 0
        %531 = vmatprep.subr.bf16.mxu0 0
        %532 = vmatpush1.bf16.msra.mxu0 0
        %533 = vmatprep.subr.bf16.mxu0 0
        %534 = vmatpush1.bf16.msra.mxu0 0
        %535 = vmatprep.mubr.bf16.mxu0 0
        %536 = vmatmul.mubr.bf16.gmra.mrb[0].mxu0 %v501
        %v537 = vpop.f32.mrb[0].mxu0
        %v538 = vadd.f32 0.0, %v537
        %v539 = vpop.f32.mrb[0].mxu0
        %v540 = vadd.f32 0.0, %v539
        %v541 = vpop.f32.mrb[0].mxu0
        %v542 = vadd.f32 0.0, %v541
        %v543 = vpop.f32.mrb[0].mxu0
        %v544 = vadd.f32 0.0, %v543
        %545 = vdwg.mxu0
        %v546 = vadd.f32 %v477, %v538
        %v547 = vadd.f32 %v478, %v540
        %v548 = vadd.f32 %v479, %v542
        %v549 = vadd.f32 %v480, %v544
        %s550 = scalar_lea.vmem [#allocation5], 40
        %v551 = vld [vmem:[%s550] sm:$0xf]
        %v552 = vld [vmem:[%s550 + $0x4] sm:$0xf]
        %v555 = vunpack.c.l.b16 %v551
        %v556 = vunpack.c.l.b16 %v552
        %v557 = vpack.c.b16 %v556, %v555
        %558 = vrot.lane.b32.xlu0 %v229, 110
        %v559 = vpop.permute.xlu0 %558
        %560 = vrot.lane.b32.xlu0 %v230, 110
        %v561 = vpop.permute.xlu0 %560
        %562 = vrot.lane.b32.xlu0 %v231, 110
        %v563 = vpop.permute.xlu0 %562
        %vm564 = vcmask 900096
        %v565 = vsel %vm564, %v559, %v561
        %v566 = vsel %vm564, %v561, %v563
        %v570 = vsel %vm243, %v557, 0
        %572 = vmatprep.subr.bf16.mxu0 %v566
        %573 = vmatpush1.bf16.msra.mxu0 %v565
        %574 = vmatprep.subr.bf16.mxu0 0
        %575 = vmatpush1.bf16.msra.mxu0 0
        %576 = vmatprep.subr.bf16.mxu0 0
        %577 = vmatpush1.bf16.msra.mxu0 0
        %578 = vmatprep.subr.bf16.mxu0 0
        %579 = vmatpush1.bf16.msra.mxu0 0
        %580 = vmatprep.subr.bf16.mxu0 0
        %581 = vmatpush1.bf16.msra.mxu0 0
        %582 = vmatprep.subr.bf16.mxu0 0
        %583 = vmatpush1.bf16.msra.mxu0 0
        %584 = vmatprep.subr.bf16.mxu0 0
        %585 = vmatpush1.bf16.msra.mxu0 0
        %586 = vmatprep.subr.bf16.mxu0 0
        %587 = vmatpush1.bf16.msra.mxu0 0
        %588 = vmatprep.subr.bf16.mxu0 0
        %589 = vmatpush1.bf16.msra.mxu0 0
        %590 = vmatprep.subr.bf16.mxu0 0
        %591 = vmatpush1.bf16.msra.mxu0 0
        %592 = vmatprep.subr.bf16.mxu0 0
        %593 = vmatpush1.bf16.msra.mxu0 0
        %594 = vmatprep.subr.bf16.mxu0 0
        %595 = vmatpush1.bf16.msra.mxu0 0
        %596 = vmatprep.subr.bf16.mxu0 0
        %597 = vmatpush1.bf16.msra.mxu0 0
        %598 = vmatprep.subr.bf16.mxu0 0
        %599 = vmatpush1.bf16.msra.mxu0 0
        %600 = vmatprep.subr.bf16.mxu0 0
        %601 = vmatpush1.bf16.msra.mxu0 0
        %602 = vmatprep.subr.bf16.mxu0 0
        %603 = vmatpush1.bf16.msra.mxu0 0
        %604 = vmatprep.mubr.bf16.mxu0 0
        %605 = vmatmul.mubr.bf16.gmra.mrb[0].mxu0 %v570
        %v606 = vpop.f32.mrb[0].mxu0
        %v607 = vadd.f32 0.0, %v606
        %v608 = vpop.f32.mrb[0].mxu0
        %v609 = vadd.f32 0.0, %v608
        %v610 = vpop.f32.mrb[0].mxu0
        %v611 = vadd.f32 0.0, %v610
        %v612 = vpop.f32.mrb[0].mxu0
        %v613 = vadd.f32 0.0, %v612
        %614 = vdwg.mxu0
        %v615 = vadd.f32 %v546, %v607
        %v616 = vadd.f32 %v547, %v609
        %v617 = vadd.f32 %v548, %v611
        %v618 = vadd.f32 %v549, %v613
        %s619 = scalar_lea.vmem [#allocation5], 48
        %v620 = vld [vmem:[%s619] sm:$0xf]
        %v621 = vld [vmem:[%s619 + $0x4] sm:$0xf]
        %v624 = vunpack.c.l.b16 %v620
        %v625 = vunpack.c.l.b16 %v621
        %v626 = vpack.c.b16 %v625, %v624
        %627 = vrot.lane.b32.xlu0 %v229, 96
        %v628 = vpop.permute.xlu0 %627
        %629 = vrot.lane.b32.xlu0 %v230, 96
        %v630 = vpop.permute.xlu0 %629
        %631 = vrot.lane.b32.xlu0 %v231, 96
        %v632 = vpop.permute.xlu0 %631
        %vm633 = vcmask 785408
        %v634 = vsel %vm633, %v628, %v630
        %v635 = vsel %vm633, %v630, %v632
        %v639 = vsel %vm243, %v626, 0
        %641 = vmatprep.subr.bf16.mxu0 %v635
        %642 = vmatpush1.bf16.msra.mxu0 %v634
        %643 = vmatprep.subr.bf16.mxu0 0
        %644 = vmatpush1.bf16.msra.mxu0 0
        %645 = vmatprep.subr.bf16.mxu0 0
        %646 = vmatpush1.bf16.msra.mxu0 0
        %647 = vmatprep.subr.bf16.mxu0 0
        %648 = vmatpush1.bf16.msra.mxu0 0
        %649 = vmatprep.subr.bf16.mxu0 0
        %650 = vmatpush1.bf16.msra.mxu0 0
        %651 = vmatprep.subr.bf16.mxu0 0
        %652 = vmatpush1.bf16.msra.mxu0 0
        %653 = vmatprep.subr.bf16.mxu0 0
        %654 = vmatpush1.bf16.msra.mxu0 0
        %655 = vmatprep.subr.bf16.mxu0 0
        %656 = vmatpush1.bf16.msra.mxu0 0
        %657 = vmatprep.subr.bf16.mxu0 0
        %658 = vmatpush1.bf16.msra.mxu0 0
        %659 = vmatprep.subr.bf16.mxu0 0
        %660 = vmatpush1.bf16.msra.mxu0 0
        %661 = vmatprep.subr.bf16.mxu0 0
        %662 = vmatpush1.bf16.msra.mxu0 0
        %663 = vmatprep.subr.bf16.mxu0 0
        %664 = vmatpush1.bf16.msra.mxu0 0
        %665 = vmatprep.subr.bf16.mxu0 0
        %666 = vmatpush1.bf16.msra.mxu0 0
        %667 = vmatprep.subr.bf16.mxu0 0
        %668 = vmatpush1.bf16.msra.mxu0 0
        %669 = vmatprep.subr.bf16.mxu0 0
        %670 = vmatpush1.bf16.msra.mxu0 0
        %671 = vmatprep.subr.bf16.mxu0 0
        %672 = vmatpush1.bf16.msra.mxu0 0
        %673 = vmatprep.mubr.bf16.mxu0 0
        %674 = vmatmul.mubr.bf16.gmra.mrb[0].mxu0 %v639
        %v675 = vpop.f32.mrb[0].mxu0
        %v676 = vadd.f32 0.0, %v675
        %v677 = vpop.f32.mrb[0].mxu0
        %v678 = vadd.f32 0.0, %v677
        %v679 = vpop.f32.mrb[0].mxu0
        %v680 = vadd.f32 0.0, %v679
        %v681 = vpop.f32.mrb[0].mxu0
        %v682 = vadd.f32 0.0, %v681
        %683 = vdwg.mxu0
        %v684 = vadd.f32 %v615, %v676
        %v685 = vadd.f32 %v616, %v678
        %v686 = vadd.f32 %v617, %v680
        %v687 = vadd.f32 %v618, %v682
        %s688 = scalar_lea.vmem [#allocation5], 56
        %v689 = vld [vmem:[%s688] sm:$0xf]
        %v690 = vld [vmem:[%s688 + $0x4] sm:$0xf]
        %v693 = vunpack.c.l.b16 %v689
        %v694 = vunpack.c.l.b16 %v690
        %v695 = vpack.c.b16 %v694, %v693
        %696 = vrot.lane.b32.xlu0 %v229, 95
        %v697 = vpop.permute.xlu0 %696
        %698 = vrot.lane.b32.xlu0 %v230, 95
        %v699 = vpop.permute.xlu0 %698
        %700 = vrot.lane.b32.xlu0 %v231, 95
        %v701 = vpop.permute.xlu0 %700
        %vm702 = vcmask 777216
        %v703 = vsel %vm702, %v697, %v699
        %v704 = vsel %vm702, %v699, %v701
        %v708 = vsel %vm243, %v695, 0
        %710 = vmatprep.subr.bf16.mxu0 %v704
        %711 = vmatpush1.bf16.msra.mxu0 %v703
        %712 = vmatprep.subr.bf16.mxu0 0
        %713 = vmatpush1.bf16.msra.mxu0 0
        %714 = vmatprep.subr.bf16.mxu0 0
        %715 = vmatpush1.bf16.msra.mxu0 0
        %716 = vmatprep.subr.bf16.mxu0 0
        %717 = vmatpush1.bf16.msra.mxu0 0
        %718 = vmatprep.subr.bf16.mxu0 0
        %719 = vmatpush1.bf16.msra.mxu0 0
        %720 = vmatprep.subr.bf16.mxu0 0
        %721 = vmatpush1.bf16.msra.mxu0 0
        %722 = vmatprep.subr.bf16.mxu0 0
        %723 = vmatpush1.bf16.msra.mxu0 0
        %724 = vmatprep.subr.bf16.mxu0 0
        %725 = vmatpush1.bf16.msra.mxu0 0
        %726 = vmatprep.subr.bf16.mxu0 0
        %727 = vmatpush1.bf16.msra.mxu0 0
        %728 = vmatprep.subr.bf16.mxu0 0
        %729 = vmatpush1.bf16.msra.mxu0 0
        %730 = vmatprep.subr.bf16.mxu0 0
        %731 = vmatpush1.bf16.msra.mxu0 0
        %732 = vmatprep.subr.bf16.mxu0 0
        %733 = vmatpush1.bf16.msra.mxu0 0
        %734 = vmatprep.subr.bf16.mxu0 0
        %735 = vmatpush1.bf16.msra.mxu0 0
        %736 = vmatprep.subr.bf16.mxu0 0
        %737 = vmatpush1.bf16.msra.mxu0 0
        %738 = vmatprep.subr.bf16.mxu0 0
        %739 = vmatpush1.bf16.msra.mxu0 0
        %740 = vmatprep.subr.bf16.mxu0 0
        %741 = vmatpush1.bf16.msra.mxu0 0
        %742 = vmatprep.mubr.bf16.mxu0 0
        %743 = vmatmul.mubr.bf16.gmra.mrb[0].mxu0 %v708
        %v744 = vpop.f32.mrb[0].mxu0
        %v745 = vadd.f32 0.0, %v744
        %v746 = vpop.f32.mrb[0].mxu0
        %v747 = vadd.f32 0.0, %v746
        %v748 = vpop.f32.mrb[0].mxu0
        %v749 = vadd.f32 0.0, %v748
        %v750 = vpop.f32.mrb[0].mxu0
        %v751 = vadd.f32 0.0, %v750
        %752 = vdwg.mxu0
        %v753 = vadd.f32 %v684, %v745
        %v754 = vadd.f32 %v685, %v747
        %v755 = vadd.f32 %v686, %v749
        %v756 = vadd.f32 %v687, %v751
        %s757 = scalar_lea.vmem [#allocation5], 64
        %v758 = vld [vmem:[%s757] sm:$0xf]
        %v759 = vld [vmem:[%s757 + $0x4] sm:$0xf]
        %v762 = vunpack.c.l.b16 %v758
        %v763 = vunpack.c.l.b16 %v759
        %v764 = vpack.c.b16 %v763, %v762
        %765 = vrot.lane.b32.xlu0 %v229, 94
        %v766 = vpop.permute.xlu0 %765
        %767 = vrot.lane.b32.xlu0 %v230, 94
        %v768 = vpop.permute.xlu0 %767
        %769 = vrot.lane.b32.xlu0 %v231, 94
        %v770 = vpop.permute.xlu0 %769
        %vm771 = vcmask 769024
        %v772 = vsel %vm771, %v766, %v768
        %v773 = vsel %vm771, %v768, %v770
        %v777 = vsel %vm243, %v764, 0
        %779 = vmatprep.subr.bf16.mxu0 %v773
        %780 = vmatpush1.bf16.msra.mxu0 %v772
        %781 = vmatprep.subr.bf16.mxu0 0
        %782 = vmatpush1.bf16.msra.mxu0 0
        %783 = vmatprep.subr.bf16.mxu0 0
        %784 = vmatpush1.bf16.msra.mxu0 0
        %785 = vmatprep.subr.bf16.mxu0 0
        %786 = vmatpush1.bf16.msra.mxu0 0
        %787 = vmatprep.subr.bf16.mxu0 0
        %788 = vmatpush1.bf16.msra.mxu0 0
        %789 = vmatprep.subr.bf16.mxu0 0
        %790 = vmatpush1.bf16.msra.mxu0 0
        %791 = vmatprep.subr.bf16.mxu0 0
        %792 = vmatpush1.bf16.msra.mxu0 0
        %793 = vmatprep.subr.bf16.mxu0 0
        %794 = vmatpush1.bf16.msra.mxu0 0
        %795 = vmatprep.subr.bf16.mxu0 0
        %796 = vmatpush1.bf16.msra.mxu0 0
        %797 = vmatprep.subr.bf16.mxu0 0
        %798 = vmatpush1.bf16.msra.mxu0 0
        %799 = vmatprep.subr.bf16.mxu0 0
        %800 = vmatpush1.bf16.msra.mxu0 0
        %801 = vmatprep.subr.bf16.mxu0 0
        %802 = vmatpush1.bf16.msra.mxu0 0
        %803 = vmatprep.subr.bf16.mxu0 0
        %804 = vmatpush1.bf16.msra.mxu0 0
        %805 = vmatprep.subr.bf16.mxu0 0
        %806 = vmatpush1.bf16.msra.mxu0 0
        %807 = vmatprep.subr.bf16.mxu0 0
        %808 = vmatpush1.bf16.msra.mxu0 0
        %809 = vmatprep.subr.bf16.mxu0 0
        %810 = vmatpush1.bf16.msra.mxu0 0
        %811 = vmatprep.mubr.bf16.mxu0 0
        %812 = vmatmul.mubr.bf16.gmra.mrb[0].mxu0 %v777
        %v813 = vpop.f32.mrb[0].mxu0
        %v814 = vadd.f32 0.0, %v813
        %v815 = vpop.f32.mrb[0].mxu0
        %v816 = vadd.f32 0.0, %v815
        %v817 = vpop.f32.mrb[0].mxu0
        %v818 = vadd.f32 0.0, %v817
        %v819 = vpop.f32.mrb[0].mxu0
        %v820 = vadd.f32 0.0, %v819
        %821 = vdwg.mxu0
        %v822 = vadd.f32 %v753, %v814
        %v823 = vadd.f32 %v754, %v816
        %v824 = vadd.f32 %v755, %v818
        %v825 = vadd.f32 %v756, %v820
        %v826 = vld [vmem:[%s2] sm:$0xff]
        %v827 = vld [vmem:[%s2 + $0x8] sm:$0xff]
        %829 = vset.pattern.permute.xlu0 0
        %830 = vperm.xlu0 %829, %v826
        %v831 = vpop.permute.xlu0 %830
        %834 = vset.pattern.permute.xlu0 0
        %835 = vperm.xlu0 %834, %v827
        %v836 = vpop.permute.xlu0 %835
        %v838 = vadd.f32 %v822, %v831
        %v839 = vadd.f32 %v823, %v831
        %v840 = vadd.f32 %v824, %v836
        %v841 = vadd.f32 %v825, %v836
        %v842 = vmax.f32 %v838, 0.0
        %v843 = vmax.f32 %v839, 0.0
        %v844 = vmax.f32 %v840, 0.0
        %v845 = vmax.f32 %v841, 0.0
        %846 = vst [vmem:[%s203] sm:$0xff] %v842
        %847 = vst [vmem:[%s203 + $0x8] sm:$0xff] %v843
        %848 = vst [vmem:[%s203 + $0x10] sm:$0xff] %v844
        %849 = vst [vmem:[%s203 + $0x18] sm:$0xff] %v845
        %s850 = sand.u32 %s97, 1
        %s851 = scalar_lea.sflag [#allocation4], %s850
        %s852 = sand.u32 %s97, 1
        %s853 = smul.addr %s852, 32
        %s854 = scalar_lea.vmem [#allocation7], %s853
        // Predicated region
        $region41: #{tpu_custom_call.1} parent=31 // pred_check
          %p855 = pneg %p107
        $region42: #{tpu_custom_call.1} parent=31 // pred_check_branch
          %857 = sbr.rel (%p855) target = $region44
        $region43: #{tpu_custom_call.1} parent=31 // pred_region
          %s859 = ssub.s32 512, 512
          %860 = vsyncadd %s851, %s859
          %s861 = smul.addr %s21, 4
          %s862 = smul.addr %s861, 128
          %s863 = scalar_lea.hbm %s3, %s862
          %s864 = sshll.u32 %s854, 4
          %s865 = int_to_ptr.vmem [resolvable:$true] %s864
          %870 = dma.vmem_to_hbm [thread:$0]  %s865, 512, %s863, %s851, 256, 256, 16
        $region44: #{tpu_custom_call.1} parent=31 // pred_fallthru
          _
      $region32: #{tpu_custom_call.1} parent=5 // pred_fallthru
        _
      %p871 = scmp.le.s32.totalorder 2, %s16
      // Predicated region
      $region45: #{tpu_custom_call.1} parent=5 // pred_check
        %p872 = pneg %p871
      $region46: #{tpu_custom_call.1} parent=5 // pred_check_branch
        %874 = sbr.rel (%p872) target = $region48
      $region47: #{tpu_custom_call.1} parent=5 // pred_region
        %s875 = ssub.s32 %s16, 2
        // Predicated region
        $region49: #{tpu_custom_call.1} parent=47 // pred_check
          %p876 = pneg %p113
        $region50: #{tpu_custom_call.1} parent=47 // pred_check_branch
          %878 = sbr.rel (%p876) target = $region52
        $region51: #{tpu_custom_call.1} parent=47 // pred_region
          %s879 = sand.u32 %s98, 1
          %s880 = scalar_lea.sflag [#allocation4], %s879
          %s881 = sand.u32 %s98, 1
          %s882 = smul.addr %s881, 32
          %s883 = scalar_lea.vmem [#allocation7], %s882
          %884 = dma.done %s880, 512
        $region52: #{tpu_custom_call.1} parent=47 // pred_fallthru
          _
      $region48: #{tpu_custom_call.1} parent=5 // pred_fallthru
        _
    $region6: #{tpu_custom_call.1} parent=1 // loop_footer
      %s20 = sadd.s32 1, %s16
    $region7: #{tpu_custom_call.1} parent=1 // loop_footer_branch
      %15 = sbr.rel target = $region3
    $region8: #{tpu_custom_call.1} parent=1 // loop_exit
      _
    %885 = vsyncpa [#allocation3], 1
    %s886 = scalar_lea.sflag [#allocation3], 1
    %887 = vsyncpa %s886, 1
    %888 = vsyncpa [#allocation6], 1
    %889 = vsyncpa [#allocation4], 1
    %s890 = scalar_lea.sflag [#allocation4], 1
    %891 = vsyncpa %s890, 1

</llo_original>
